<compile_context>
chip_gen: v7x
topology: tpu7x:2x2x1
jax: 0.10.0
libtpu: 0.0.40
codegen_flags: <defaults>
</compile_context>

<pallas_src>
import functools

import jax
import jax.numpy as jnp
from jax.experimental import pallas as pl
from jax.experimental.pallas import tpu as pltpu


def mlp_kernel(x_ref, w1_ref, b1_ref, w2_ref, b2_ref, w3_ref, b3_ref, o_ref):
    # x_ref: [TB, 32] f32 (cast to bf16 in-kernel, hidden under the DMA);
    # weights in PyTorch [out, in] layout (bf16); biases as [out, 1] f32
    # columns; o_ref: [1, TB] f32 (lane-dense output row).
    x = x_ref[...].astype(jnp.bfloat16)                               # [TB, 32]

    # Layer 1: h1 = relu(W1 @ x^T + b1) -> [64, TB]; f32 MXU accumulation.
    # Contracting over the last dim of both operands keeps batch on lanes.
    h1 = jnp.einsum("oi,bi->ob", w1_ref[...], x,
                    preferred_element_type=jnp.float32) + b1_ref[...]
    h1 = jnp.maximum(h1, 0.0)

    # Layer 2: h2 = relu(W2 @ h1 + b2) -> [32, TB]
    h2 = jnp.dot(w2_ref[...], h1.astype(jnp.bfloat16),
                 preferred_element_type=jnp.float32) + b2_ref[...]
    h2 = jnp.maximum(h2, 0.0)

    # Layer 3: out = W3 @ h2 + b3 -> [1, TB] (lane-dense output row)
    out = jnp.dot(w3_ref[...], h2.astype(jnp.bfloat16),
                  preferred_element_type=jnp.float32) + b3_ref[...]
    o_ref[...] = out.astype(o_ref.dtype)


@functools.partial(jax.jit, static_argnames=("block_rows",))
def mlp_forward(x, w1, b1, w2, b2, w3, b3, *, block_rows=2048):
    """x: [B, 32] f32.  Weights in PyTorch layout: w1 [64,32], w2 [32,64],
    w3 [1,32]; biases b1 [64], b2 [32], b3 [1].  Returns [B, 1] f32."""
    B, fin = x.shape
    assert fin == 32

    if B <= block_rows:
        # Single full-array block: always layout-legal, no masking, no grid loop.
        TB = B
    else:
        # 128-multiple tile; Pallas masks the ragged last block (cdiv grid).
        TB = max(128, (block_rows // 128) * 128)
    grid = (pl.cdiv(B, TB),)

    # Weights/biases are tiny; cast/reshape once in the wrapper.
    w1b, w2b, w3b = (w.astype(jnp.bfloat16) for w in (w1, w2, w3))
    b1c = b1.reshape(-1, 1).astype(jnp.float32)   # [64, 1]
    b2c = b2.reshape(-1, 1).astype(jnp.float32)   # [32, 1]
    b3c = b3.reshape(-1, 1).astype(jnp.float32)   # [1, 1]

    const = lambda shape: pl.BlockSpec(shape, lambda i: (0, 0))

    out = pl.pallas_call(
        mlp_kernel,
        out_shape=jax.ShapeDtypeStruct((1, B), jnp.float32),
        grid=grid,
        in_specs=[
            pl.BlockSpec((TB, 32), lambda i: (i, 0)),    # x tile: streamed
            const(w1b.shape), const(b1c.shape),           # VMEM-resident params
            const(w2b.shape), const(b2c.shape),
            const(w3b.shape), const(b3c.shape),
        ],
        out_specs=pl.BlockSpec((1, TB), lambda i: (0, i)),
        compiler_params=pltpu.CompilerParams(
            dimension_semantics=("parallel",)),
    )(x, w1b, b1c, w2b, b2c, w3b, b3c)

    # (1, B) -> (B, 1) is a free contiguous reshape.
    return out.reshape(B, 1)


def init_params(key):
    # PyTorch nn.Linear layout: W [out, in], b [out]; uniform(-1/sqrt(fan_in), ...).
    def linear(key, fan_in, fan_out):
        kw, kb = jax.random.split(key)
        bound = 1.0 / jnp.sqrt(jnp.float32(fan_in))
        w = jax.random.uniform(kw, (fan_out, fan_in), jnp.float32, -bound, bound)
        b = jax.random.uniform(kb, (fan_out,), jnp.float32, -bound, bound)
        return w, b

    k1, k2, k3 = jax.random.split(key, 3)
    w1, b1 = linear(k1, 32, 64)
    w2, b2 = linear(k2, 64, 32)
    w3, b3 = linear(k3, 32, 1)
    return w1, b1, w2, b2, w3, b3


def ref_forward(x, w1, b1, w2, b2, w3, b3):
    # Plain-JAX reference mirroring the kernel's bf16-input / f32-accumulate math.
    xb = x.astype(jnp.bfloat16)
    w1b, w2b, w3b = (w.astype(jnp.bfloat16) for w in (w1, w2, w3))
    h1 = jnp.maximum(
        jnp.dot(xb, w1b.T, preferred_element_type=jnp.float32) + b1[None, :], 0.0)
    h2 = jnp.maximum(
        jnp.dot(h1.astype(jnp.bfloat16), w2b.T,
                preferred_element_type=jnp.float32) + b2[None, :], 0.0)
    return (jnp.dot(h2.astype(jnp.bfloat16), w3b.T,
                    preferred_element_type=jnp.float32) + b3[None, :])


if __name__ == "__main__":
    key = jax.random.PRNGKey(0)
    kp, kx = jax.random.split(key)
    params = init_params(kp)

    batch = 8
    x = jax.random.normal(kx, (batch, 32), jnp.float32)

    out = mlp_forward(x, *params)
    out = jax.block_until_ready(out)
    assert out.shape == (batch, 1)

    ref = ref_forward(x, *params)
    max_err = float(jnp.max(jnp.abs(out - ref)))
    assert jnp.allclose(out, ref, atol=2e-2, rtol=2e-2), max_err

    print("KERNEL_OK")
</pallas_src>

<mosaic_0001>
module attributes {stable_mosaic.version = 11 : i64} {
  func.func @mlp_kernel(%arg0: i32, %arg1: memref<8x32xf32, #tpu.memory_space<vmem>>, %arg2: memref<64x32xbf16, #tpu.memory_space<vmem>>, %arg3: memref<64x1xf32, #tpu.memory_space<vmem>>, %arg4: memref<32x64xbf16, #tpu.memory_space<vmem>>, %arg5: memref<32x1xf32, #tpu.memory_space<vmem>>, %arg6: memref<1x32xbf16, #tpu.memory_space<vmem>>, %arg7: memref<1x1xf32, #tpu.memory_space<vmem>>, %arg8: memref<1x8xf32, #tpu.memory_space<vmem>>) attributes {dimension_semantics = [#tpu.dimension_semantics<parallel>], iteration_bounds = array<i64: 1>, scalar_prefetch = 0 : i64, scratch_operands = 0 : i64, tpu.core_type = #tpu.core_type<tc>, window_params = [{transform_indices = @transform_0, window_bounds = array<i64: 8, 32>}, {pipeline_mode = #tpu.pipeline_mode<synchronous>, transform_indices = @transform_1, window_bounds = array<i64: 64, 32>}, {pipeline_mode = #tpu.pipeline_mode<synchronous>, transform_indices = @transform_2, window_bounds = array<i64: 64, 1>}, {pipeline_mode = #tpu.pipeline_mode<synchronous>, transform_indices = @transform_3, window_bounds = array<i64: 32, 64>}, {pipeline_mode = #tpu.pipeline_mode<synchronous>, transform_indices = @transform_4, window_bounds = array<i64: 32, 1>}, {pipeline_mode = #tpu.pipeline_mode<synchronous>, transform_indices = @transform_5, window_bounds = array<i64: 1, 32>}, {pipeline_mode = #tpu.pipeline_mode<synchronous>, transform_indices = @transform_6, window_bounds = array<i64: 1, 1>}, {transform_indices = @transform_7, window_bounds = array<i64: 1, 8>}]} {
    %c0 = arith.constant 0 : index
    %c0_0 = arith.constant 0 : index
    %0 = vector.load %arg1[%c0, %c0_0] : memref<8x32xf32, #tpu.memory_space<vmem>>, vector<8x32xf32>
    %1 = arith.truncf %0 : vector<8x32xf32> to vector<8x32xbf16>
    %c0_1 = arith.constant 0 : index
    %c0_2 = arith.constant 0 : index
    %2 = vector.load %arg2[%c0_1, %c0_2] : memref<64x32xbf16, #tpu.memory_space<vmem>>, vector<64x32xbf16>
    "tpu.trace_start"() <{level = 10 : i32, message = "oi,bi->ob"}> : () -> ()
    %cst = arith.constant dense<0.000000e+00> : vector<64x8xf32>
    %3 = tpu.matmul %2, %1, %cst {dimension_numbers = #tpu.dot_dimension_numbers<[1], [1], [0], [0], [0, 0, 1, 0], [], []>} : vector<64x32xbf16>, vector<8x32xbf16>, vector<64x8xf32> -> vector<64x8xf32>
    "tpu.trace_stop"() : () -> ()
    %c0_3 = arith.constant 0 : index
    %c0_4 = arith.constant 0 : index
    %4 = vector.load %arg3[%c0_3, %c0_4] : memref<64x1xf32, #tpu.memory_space<vmem>>, vector<64x1xf32>
    %5 = vector.broadcast %4 : vector<64x1xf32> to vector<64x8xf32>
    %6 = arith.addf %3, %5 : vector<64x8xf32>
    %cst_5 = arith.constant 0.000000e+00 : f32
    %7 = vector.broadcast %cst_5 : f32 to vector<64x8xf32>
    %8 = arith.maximumf %6, %7 : vector<64x8xf32>
    %c0_6 = arith.constant 0 : index
    %c0_7 = arith.constant 0 : index
    %9 = vector.load %arg4[%c0_6, %c0_7] : memref<32x64xbf16, #tpu.memory_space<vmem>>, vector<32x64xbf16>
    %10 = arith.truncf %8 : vector<64x8xf32> to vector<64x8xbf16>
    %cst_8 = arith.constant dense<0.000000e+00> : vector<32x8xf32>
    %11 = tpu.matmul %9, %10, %cst_8 {dimension_numbers = #tpu.dot_dimension_numbers<[1], [0], [0], [1], [0, 0, 1, 1], [], []>} : vector<32x64xbf16>, vector<64x8xbf16>, vector<32x8xf32> -> vector<32x8xf32>
    %c0_9 = arith.constant 0 : index
    %c0_10 = arith.constant 0 : index
    %12 = vector.load %arg5[%c0_9, %c0_10] : memref<32x1xf32, #tpu.memory_space<vmem>>, vector<32x1xf32>
    %13 = vector.broadcast %12 : vector<32x1xf32> to vector<32x8xf32>
    %14 = arith.addf %11, %13 : vector<32x8xf32>
    %cst_11 = arith.constant 0.000000e+00 : f32
    %15 = vector.broadcast %cst_11 : f32 to vector<32x8xf32>
    %16 = arith.maximumf %14, %15 : vector<32x8xf32>
    %c0_12 = arith.constant 0 : index
    %c0_13 = arith.constant 0 : index
    %17 = vector.load %arg6[%c0_12, %c0_13] : memref<1x32xbf16, #tpu.memory_space<vmem>>, vector<1x32xbf16>
    %18 = arith.truncf %16 : vector<32x8xf32> to vector<32x8xbf16>
    %cst_14 = arith.constant dense<0.000000e+00> : vector<1x8xf32>
    %19 = tpu.matmul %17, %18, %cst_14 {dimension_numbers = #tpu.dot_dimension_numbers<[1], [0], [0], [1], [0, 0, 1, 1], [], []>} : vector<1x32xbf16>, vector<32x8xbf16>, vector<1x8xf32> -> vector<1x8xf32>
    %c0_15 = arith.constant 0 : index
    %c0_16 = arith.constant 0 : index
    %20 = vector.load %arg7[%c0_15, %c0_16] : memref<1x1xf32, #tpu.memory_space<vmem>>, vector<1x1xf32>
    %21 = vector.broadcast %20 : vector<1x1xf32> to vector<1x8xf32>
    %22 = arith.addf %19, %21 : vector<1x8xf32>
    %c0_17 = arith.constant 0 : index
    %c0_18 = arith.constant 0 : index
    %23 = vector.load %arg8[%c0_17, %c0_18] : memref<1x8xf32, #tpu.memory_space<vmem>>, vector<1x8xf32>
    tpu.vector_store %arg8[%c0_17, %c0_18], %22 {strides = array<i32>} : memref<1x8xf32, #tpu.memory_space<vmem>>, vector<1x8xf32>,
    return
  }
  func.func @transform_0(%arg0: i32) -> (i32, i32) {
    %c0_i32 = arith.constant 0 : i32
    %c0_i32_0 = arith.constant 0 : i32
    return %arg0, %c0_i32 : i32, i32
  }
  func.func @transform_1(%arg0: i32) -> (i32, i32) {
    %c0_i32 = arith.constant 0 : i32
    %c0_i32_0 = arith.constant 0 : i32
    %c0_i32_1 = arith.constant 0 : i32
    return %c0_i32, %c0_i32_0 : i32, i32
  }
  func.func @transform_2(%arg0: i32) -> (i32, i32) {
    %c0_i32 = arith.constant 0 : i32
    %c0_i32_0 = arith.constant 0 : i32
    %c0_i32_1 = arith.constant 0 : i32
    return %c0_i32, %c0_i32_0 : i32, i32
  }
  func.func @transform_3(%arg0: i32) -> (i32, i32) {
    %c0_i32 = arith.constant 0 : i32
    %c0_i32_0 = arith.constant 0 : i32
    %c0_i32_1 = arith.constant 0 : i32
    return %c0_i32, %c0_i32_0 : i32, i32
  }
  func.func @transform_4(%arg0: i32) -> (i32, i32) {
    %c0_i32 = arith.constant 0 : i32
    %c0_i32_0 = arith.constant 0 : i32
    %c0_i32_1 = arith.constant 0 : i32
    return %c0_i32, %c0_i32_0 : i32, i32
  }
  func.func @transform_5(%arg0: i32) -> (i32, i32) {
    %c0_i32 = arith.constant 0 : i32
    %c0_i32_0 = arith.constant 0 : i32
    %c0_i32_1 = arith.constant 0 : i32
    return %c0_i32, %c0_i32_0 : i32, i32
  }
  func.func @transform_6(%arg0: i32) -> (i32, i32) {
    %c0_i32 = arith.constant 0 : i32
    %c0_i32_0 = arith.constant 0 : i32
    %c0_i32_1 = arith.constant 0 : i32
    return %c0_i32, %c0_i32_0 : i32, i32
  }
  func.func @transform_7(%arg0: i32) -> (i32, i32) {
    %c0_i32 = arith.constant 0 : i32
    %c0_i32_0 = arith.constant 0 : i32
    return %c0_i32, %arg0 : i32, i32
  }
}

</mosaic_0001>

<llo_original>
// kernel: mlp_forward.1
$region0: #{mlp_forward.1}
  #allocation0 [shape = 'u32[]', space=smem, size = 0x4, offset = 0x4, fixed_abs, tag = 'smem constant byte address 0x4 - core index']
  #allocation1 [shape = 'u32[144,128]{1,0:T(1,128)}', space=vmem, size = 0x12000, scoped, tag = 'internal scratch']
  #allocation2 [shape = 'f32[1,1]{1,0:T(1,128)S(1)}', space=vmem, size = 0x200, scoped, tag = 'scoped memory for mlp_forward.1']
  %s0 = inlined_call_operand.vmem [shape: f32[8,32], index: 0, kind: input, shape index: {}]
  %s1 = inlined_call_operand.vmem [shape: bf16[64,32], index: 1, kind: input, shape index: {}]
  %s2 = inlined_call_operand.vmem [shape: f32[64,1], index: 2, kind: input, shape index: {}]
  %s3 = inlined_call_operand.vmem [shape: bf16[32,64], index: 3, kind: input, shape index: {}]
  %s4 = inlined_call_operand.vmem [shape: f32[32,1], index: 4, kind: input, shape index: {}]
  %s5 = inlined_call_operand.vmem [shape: bf16[1,32], index: 5, kind: input, shape index: {}]
  %s6 = inlined_call_operand.<no memory space> [shape: f32[1,1], index: 6, kind: input, shape index: {}]
  %s7 = inlined_call_operand.hbm [shape: f32[1,8], index: 7, kind: output, shape index: {}]
  %s8 = sld [smem:[#allocation0]]
  $region38: #{mlp_forward.1} parent=0
    _
  %s10 = ssub.s32 1, %s8
  %s11 = scalar_select 0, %s10, %s8
  %v12 = vstv %s6
  %13 = vst [vmem:[#allocation2] sm:$0x1] %v12
  $region1: #{mlp_forward.1} parent=0
    #allocation3 [shape = 'u8[512]{0}', space=vmem, size = 0x400, scoped, tag = 'output window, operand 0, single buffered']
    #allocation4 [shape = 's32[1]{0}', space=sflag, size = 0x4, scoped, tag = 'scoped memory for mlp_forward.1']
    %14 = vsyncpa [#allocation4], 0
    // Predicated region
    $region2: #{mlp_forward.1} parent=1 // pred_check
      _
    $region3: #{mlp_forward.1} parent=1 // pred_check_branch
      %16 = sbr.rel (0) target = $region5
    $region4: #{mlp_forward.1} parent=1 // pred_region
      _
    $region5: #{mlp_forward.1} parent=1 // pred_fallthru
      _
    // Predicated region
    $region6: #{mlp_forward.1} parent=1 // pred_check
      _
    $region7: #{mlp_forward.1} parent=1 // pred_check_branch
      %18 = sbr.rel (0) target = $region9
    $region8: #{mlp_forward.1} parent=1 // pred_region
      _
    $region9: #{mlp_forward.1} parent=1 // pred_fallthru
      _
    // Predicated region
    $region10: #{mlp_forward.1} parent=1 // pred_check
      _
    $region11: #{mlp_forward.1} parent=1 // pred_check_branch
      %20 = sbr.rel (0) target = $region13
    $region12: #{mlp_forward.1} parent=1 // pred_region
      _
    $region13: #{mlp_forward.1} parent=1 // pred_fallthru
      _
    // Predicated region
    $region14: #{mlp_forward.1} parent=1 // pred_check
      _
    $region15: #{mlp_forward.1} parent=1 // pred_check_branch
      %22 = sbr.rel (0) target = $region17
    $region16: #{mlp_forward.1} parent=1 // pred_region
      _
    $region17: #{mlp_forward.1} parent=1 // pred_fallthru
      _
    // Predicated region
    $region18: #{mlp_forward.1} parent=1 // pred_check
      _
    $region19: #{mlp_forward.1} parent=1 // pred_check_branch
      %24 = sbr.rel (0) target = $region21
    $region20: #{mlp_forward.1} parent=1 // pred_region
      _
    $region21: #{mlp_forward.1} parent=1 // pred_fallthru
      _
    // Predicated region
    $region22: #{mlp_forward.1} parent=1 // pred_check
      _
    $region23: #{mlp_forward.1} parent=1 // pred_check_branch
      %26 = sbr.rel (0) target = $region25
    $region24: #{mlp_forward.1} parent=1 // pred_region
      _
    $region25: #{mlp_forward.1} parent=1 // pred_fallthru
      _
    // Predicated region
    $region26: #{mlp_forward.1} parent=1 // pred_check
      _
    $region27: #{mlp_forward.1} parent=1 // pred_check_branch
      %28 = sbr.rel (0) target = $region29
    $region28: #{mlp_forward.1} parent=1 // pred_region
      _
    $region29: #{mlp_forward.1} parent=1 // pred_fallthru
      _
    %v30 = vld [vmem:[%s0] sm:$0xff]
    %v31 = vpack.c.bf16 %v30, %v30
    %v32 = vld [vmem:[%s1] sm:$0xf]
    %v33 = vld [vmem:[%s1 + $0x4] sm:$0xf]
    %v34 = vld [vmem:[%s1 + $0x8] sm:$0xf]
    %v35 = vld [vmem:[%s1 + $0xc] sm:$0xf]
    %v36 = vld [vmem:[%s1 + $0x10] sm:$0xf]
    %v37 = vld [vmem:[%s1 + $0x14] sm:$0xf]
    %v38 = vld [vmem:[%s1 + $0x18] sm:$0xf]
    %v39 = vld [vmem:[%s1 + $0x1c] sm:$0xf]
    %v40 = vld [vmem:[%s2] sm:$0xff]
    %v41 = vld [vmem:[%s2 + $0x8] sm:$0xff]
    %v42 = vld [vmem:[%s2 + $0x10] sm:$0xff]
    %v43 = vld [vmem:[%s2 + $0x18] sm:$0xff]
    %v44 = vld [vmem:[%s2 + $0x20] sm:$0xff]
    %v45 = vld [vmem:[%s2 + $0x28] sm:$0xff]
    %v46 = vld [vmem:[%s2 + $0x30] sm:$0xff]
    %v47 = vld [vmem:[%s2 + $0x38] sm:$0xff]
    %49 = vset.pattern.permute.xlu0 0
    %50 = vperm.xlu0 %49, %v40
    %v51 = vpop.permute.xlu0 %50
    %54 = vset.pattern.permute.xlu0 0
    %55 = vperm.xlu0 %54, %v41
    %v56 = vpop.permute.xlu0 %55
    %59 = vset.pattern.permute.xlu0 0
    %60 = vperm.xlu0 %59, %v42
    %v61 = vpop.permute.xlu0 %60
    %64 = vset.pattern.permute.xlu0 0
    %65 = vperm.xlu0 %64, %v43
    %v66 = vpop.permute.xlu0 %65
    %69 = vset.pattern.permute.xlu0 0
    %70 = vperm.xlu0 %69, %v44
    %v71 = vpop.permute.xlu0 %70
    %74 = vset.pattern.permute.xlu0 0
    %75 = vperm.xlu0 %74, %v45
    %v76 = vpop.permute.xlu0 %75
    %79 = vset.pattern.permute.xlu0 0
    %80 = vperm.xlu0 %79, %v46
    %v81 = vpop.permute.xlu0 %80
    %84 = vset.pattern.permute.xlu0 0
    %85 = vperm.xlu0 %84, %v47
    %v86 = vpop.permute.xlu0 %85
    %v96 = vunpack.c.l.b16 %v32
    %v97 = vunpack.c.l.b16 %v33
    %v98 = vunpack.c.l.b16 %v34
    %v99 = vunpack.c.l.b16 %v35
    %v100 = vunpack.c.l.b16 %v36
    %v101 = vunpack.c.l.b16 %v37
    %v102 = vunpack.c.l.b16 %v38
    %v103 = vunpack.c.l.b16 %v39
    %v104 = vpack.c.b16 %v97, %v96
    %v105 = vpack.c.b16 %v99, %v98
    %v106 = vpack.c.b16 %v101, %v100
    %v107 = vpack.c.b16 %v103, %v102
    %vm108 = vcmask 261120
    %v110 = vsel %vm108, %v104, 0
    %v113 = vsel %vm108, %v105, 0
    %v116 = vsel %vm108, %v106, 0
    %v119 = vsel %vm108, %v107, 0
    %v122 = vsel %vm108, %v31, 0
    %124 = vmatprep.subr.bf16.mxu0 0
    %125 = vmatpush1.bf16.xpose.msra.mxu0 %v122
    %126 = vmatprep.subr.bf16.mxu0 0
    %127 = vmatpush1.bf16.xpose.msra.mxu0 0
    %128 = vmatprep.subr.bf16.mxu0 0
    %129 = vmatpush1.bf16.xpose.msra.mxu0 0
    %130 = vmatprep.subr.bf16.mxu0 0
    %131 = vmatpush1.bf16.xpose.msra.mxu0 0
    %132 = vmatprep.subr.bf16.mxu0 0
    %133 = vmatpush1.bf16.xpose.msra.mxu0 0
    %134 = vmatprep.subr.bf16.mxu0 0
    %135 = vmatpush1.bf16.xpose.msra.mxu0 0
    %136 = vmatprep.subr.bf16.mxu0 0
    %137 = vmatpush1.bf16.xpose.msra.mxu0 0
    %138 = vmatprep.subr.bf16.mxu0 0
    %139 = vmatpush1.bf16.xpose.msra.mxu0 0
    %140 = vmatprep.subr.bf16.mxu0 0
    %141 = vmatpush1.bf16.xpose.msra.mxu0 0
    %142 = vmatprep.subr.bf16.mxu0 0
    %143 = vmatpush1.bf16.xpose.msra.mxu0 0
    %144 = vmatprep.subr.bf16.mxu0 0
    %145 = vmatpush1.bf16.xpose.msra.mxu0 0
    %146 = vmatprep.subr.bf16.mxu0 0
    %147 = vmatpush1.bf16.xpose.msra.mxu0 0
    %148 = vmatprep.subr.bf16.mxu0 0
    %149 = vmatpush1.bf16.xpose.msra.mxu0 0
    %150 = vmatprep.subr.bf16.mxu0 0
    %151 = vmatpush1.bf16.xpose.msra.mxu0 0
    %152 = vmatprep.subr.bf16.mxu0 0
    %153 = vmatpush1.bf16.xpose.msra.mxu0 0
    %154 = vmatprep.subr.bf16.mxu0 0
    %155 = vmatpush1.bf16.xpose.msra.mxu0 0
    %156 = vmatprep.mubr.bf16.mxu0 0
    %157 = vmatmul.mubr.bf16.gmra.mrb[0].mxu0 %v110
    %v158 = vpop.f32.mrb[0].mxu0
    %v159 = vadd.f32 %v51, %v158
    %v160 = vpop.f32.mrb[0].mxu0
    %v161 = vpop.f32.mrb[0].mxu0
    %v162 = vadd.f32 %v56, %v161
    %v163 = vpop.f32.mrb[0].mxu0
    %164 = vmatprep.mubr.bf16.mxu0 0
    %165 = vmatmul.mubr.bf16.gmra.mrb[0].mxu0 %v113
    %v166 = vpop.f32.mrb[0].mxu0
    %v167 = vadd.f32 %v61, %v166
    %v168 = vpop.f32.mrb[0].mxu0
    %v169 = vpop.f32.mrb[0].mxu0
    %v170 = vadd.f32 %v66, %v169
    %v171 = vpop.f32.mrb[0].mxu0
    %172 = vmatprep.mubr.bf16.mxu0 0
    %173 = vmatmul.mubr.bf16.gmra.mrb[0].mxu0 %v116
    %v174 = vpop.f32.mrb[0].mxu0
    %v175 = vadd.f32 %v71, %v174
    %v176 = vpop.f32.mrb[0].mxu0
    %v177 = vpop.f32.mrb[0].mxu0
    %v178 = vadd.f32 %v76, %v177
    %v179 = vpop.f32.mrb[0].mxu0
    %180 = vmatprep.mubr.bf16.mxu0 0
    %181 = vmatmul.mubr.bf16.gmra.mrb[0].mxu0 %v119
    %v182 = vpop.f32.mrb[0].mxu0
    %v183 = vadd.f32 %v81, %v182
    %v184 = vpop.f32.mrb[0].mxu0
    %v185 = vpop.f32.mrb[0].mxu0
    %v186 = vadd.f32 %v86, %v185
    %v187 = vpop.f32.mrb[0].mxu0
    %188 = vdwg.mxu0
    %v189 = vmax.f32 %v159, 0.0
    %v190 = vmax.f32 %v162, 0.0
    %v191 = vmax.f32 %v167, 0.0
    %v192 = vmax.f32 %v170, 0.0
    %v193 = vmax.f32 %v175, 0.0
    %v194 = vmax.f32 %v178, 0.0
    %v195 = vmax.f32 %v183, 0.0
    %v196 = vmax.f32 %v186, 0.0
    %v197 = vld [vmem:[%s3] sm:$0xf]
    %v198 = vld [vmem:[%s3 + $0x4] sm:$0xf]
    %v199 = vld [vmem:[%s3 + $0x8] sm:$0xf]
    %v200 = vld [vmem:[%s3 + $0xc] sm:$0xf]
    %v201 = vpack.c.bf16 %v190, %v189
    %v202 = vpack.c.bf16 %v192, %v191
    %v203 = vpack.c.bf16 %v194, %v193
    %v204 = vpack.c.bf16 %v196, %v195
    %v205 = vld [vmem:[%s4] sm:$0xff]
    %v206 = vld [vmem:[%s4 + $0x8] sm:$0xff]
    %v207 = vld [vmem:[%s4 + $0x10] sm:$0xff]
    %v208 = vld [vmem:[%s4 + $0x18] sm:$0xff]
    %210 = vset.pattern.permute.xlu0 0
    %211 = vperm.xlu0 %210, %v205
    %v212 = vpop.permute.xlu0 %211
    %215 = vset.pattern.permute.xlu0 0
    %216 = vperm.xlu0 %215, %v206
    %v217 = vpop.permute.xlu0 %216
    %220 = vset.pattern.permute.xlu0 0
    %221 = vperm.xlu0 %220, %v207
    %v222 = vpop.permute.xlu0 %221
    %225 = vset.pattern.permute.xlu0 0
    %226 = vperm.xlu0 %225, %v208
    %v227 = vpop.permute.xlu0 %226
    %v233 = vunpack.c.l.b16 %v197
    %v234 = vunpack.c.l.b16 %v198
    %v235 = vunpack.c.l.b16 %v199
    %v236 = vunpack.c.l.b16 %v200
    %v237 = vpack.c.b16 %v234, %v233
    %v238 = vpack.c.b16 %v236, %v235
    %vm239 = vcmask 523264
    %v241 = vsel %vm239, %v237, 0
    %v244 = vsel %vm239, %v238, 0
    %246 = vmatprep.subr.bf16.mxu0 0
    %247 = vmatpush1.bf16.msra.mxu0 %v201
    %248 = vmatprep.subr.bf16.mxu0 0
    %249 = vmatpush1.bf16.msra.mxu0 %v202
    %250 = vmatprep.subr.bf16.mxu0 0
    %251 = vmatpush1.bf16.msra.mxu0 %v203
    %252 = vmatprep.subr.bf16.mxu0 0
    %253 = vmatpush1.bf16.msra.mxu0 %v204
    %254 = vmatprep.subr.bf16.mxu0 0
    %255 = vmatpush1.bf16.msra.mxu0 0
    %256 = vmatprep.subr.bf16.mxu0 0
    %257 = vmatpush1.bf16.msra.mxu0 0
    %258 = vmatprep.subr.bf16.mxu0 0
    %259 = vmatpush1.bf16.msra.mxu0 0
    %260 = vmatprep.subr.bf16.mxu0 0
    %261 = vmatpush1.bf16.msra.mxu0 0
    %262 = vmatprep.subr.bf16.mxu0 0
    %263 = vmatpush1.bf16.msra.mxu0 0
    %264 = vmatprep.subr.bf16.mxu0 0
    %265 = vmatpush1.bf16.msra.mxu0 0
    %266 = vmatprep.subr.bf16.mxu0 0
    %267 = vmatpush1.bf16.msra.mxu0 0
    %268 = vmatprep.subr.bf16.mxu0 0
    %269 = vmatpush1.bf16.msra.mxu0 0
    %270 = vmatprep.subr.bf16.mxu0 0
    %271 = vmatpush1.bf16.msra.mxu0 0
    %272 = vmatprep.subr.bf16.mxu0 0
    %273 = vmatpush1.bf16.msra.mxu0 0
    %274 = vmatprep.subr.bf16.mxu0 0
    %275 = vmatpush1.bf16.msra.mxu0 0
    %276 = vmatprep.subr.bf16.mxu0 0
    %277 = vmatpush1.bf16.msra.mxu0 0
    %278 = vmatprep.mubr.bf16.mxu0 0
    %279 = vmatmul.mubr.bf16.gmra.mrb[0].mxu0 %v241
    %v280 = vpop.f32.mrb[0].mxu0
    %v281 = vadd.f32 %v212, %v280
    %v282 = vpop.f32.mrb[0].mxu0
    %v283 = vpop.f32.mrb[0].mxu0
    %v284 = vadd.f32 %v217, %v283
    %v285 = vpop.f32.mrb[0].mxu0
    %286 = vmatprep.mubr.bf16.mxu0 0
    %287 = vmatmul.mubr.bf16.gmra.mrb[0].mxu0 %v244
    %v288 = vpop.f32.mrb[0].mxu0
    %v289 = vadd.f32 %v222, %v288
    %v290 = vpop.f32.mrb[0].mxu0
    %v291 = vpop.f32.mrb[0].mxu0
    %v292 = vadd.f32 %v227, %v291
    %v293 = vpop.f32.mrb[0].mxu0
    %294 = vdwg.mxu0
    %v295 = vmax.f32 %v281, 0.0
    %v296 = vmax.f32 %v284, 0.0
    %v297 = vmax.f32 %v289, 0.0
    %v298 = vmax.f32 %v292, 0.0
    %v299 = vld [vmem:[%s5] sm:$0x1]
    %v300 = vpack.c.bf16 %v296, %v295
    %v301 = vpack.c.bf16 %v298, %v297
    %v302 = vld [vmem:[#allocation2] sm:$0x1]
    %304 = vset.pattern.permute.xlu0 0
    %305 = vperm.xlu0 %304, %v302
    %v306 = vpop.permute.xlu0 %305
    %v308 = vlaneseq
    %v309 = vshrl.u32 %v308, 7
    %v310 = vsub.s32 0, %v309
    %v311 = vrot.slane %v306, %v310
    %v313 = vsel %vm108, %v299, 0
    %315 = vmatprep.subr.bf16.mxu0 0
    %316 = vmatpush1.bf16.msra.mxu0 %v300
    %317 = vmatprep.subr.bf16.mxu0 0
    %318 = vmatpush1.bf16.msra.mxu0 %v301
    %319 = vmatprep.subr.bf16.mxu0 0
    %320 = vmatpush1.bf16.msra.mxu0 0
    %321 = vmatprep.subr.bf16.mxu0 0
    %322 = vmatpush1.bf16.msra.mxu0 0
    %323 = vmatprep.subr.bf16.mxu0 0
    %324 = vmatpush1.bf16.msra.mxu0 0
    %325 = vmatprep.subr.bf16.mxu0 0
    %326 = vmatpush1.bf16.msra.mxu0 0
    %327 = vmatprep.subr.bf16.mxu0 0
    %328 = vmatpush1.bf16.msra.mxu0 0
    %329 = vmatprep.subr.bf16.mxu0 0
    %330 = vmatpush1.bf16.msra.mxu0 0
    %331 = vmatprep.subr.bf16.mxu0 0
    %332 = vmatpush1.bf16.msra.mxu0 0
    %333 = vmatprep.subr.bf16.mxu0 0
    %334 = vmatpush1.bf16.msra.mxu0 0
    %335 = vmatprep.subr.bf16.mxu0 0
    %336 = vmatpush1.bf16.msra.mxu0 0
    %337 = vmatprep.subr.bf16.mxu0 0
    %338 = vmatpush1.bf16.msra.mxu0 0
    %339 = vmatprep.subr.bf16.mxu0 0
    %340 = vmatpush1.bf16.msra.mxu0 0
    %341 = vmatprep.subr.bf16.mxu0 0
    %342 = vmatpush1.bf16.msra.mxu0 0
    %343 = vmatprep.subr.bf16.mxu0 0
    %344 = vmatpush1.bf16.msra.mxu0 0
    %345 = vmatprep.subr.bf16.mxu0 0
    %346 = vmatpush1.bf16.msra.mxu0 0
    %347 = vmatprep.mubr.bf16.mxu0 0
    %348 = vmatmul.mubr.bf16.gmra.mrb[0].mxu0 %v313
    %v349 = vpop.f32.mrb[0].mxu0
    %v350 = vadd.f32 %v311, %v349
    %v351 = vpop.f32.mrb[0].mxu0
    %v352 = vpop.f32.mrb[0].mxu0
    %v353 = vpop.f32.mrb[0].mxu0
    %354 = vdwg.mxu0
    %vm355 = vcmask 57344
    %356 = vst.msk [vmem:[#allocation3] sm:$0x1] %vm355, %v350
    // Predicated region
    $region30: #{mlp_forward.1} parent=1 // pred_check
      _
    $region31: #{mlp_forward.1} parent=1 // pred_check_branch
      %358 = sbr.rel (0) target = $region33
    $region32: #{mlp_forward.1} parent=1 // pred_region
      %s360 = ssub.s32 16, 16
      %361 = vsyncadd [#allocation4], %s360
      %s363 = sshll.u32 [#allocation3], 4
      %s364 = int_to_ptr.vmem [resolvable:$true] %s363
      %366 = dma.vmem_to_hbm [thread:$0]  %s364, 16, %s7, [#allocation4]
    $region33: #{mlp_forward.1} parent=1 // pred_fallthru
      _
    // Predicated region
    $region34: #{mlp_forward.1} parent=1 // pred_check
      _
    $region35: #{mlp_forward.1} parent=1 // pred_check_branch
      %368 = sbr.rel (0) target = $region37
    $region36: #{mlp_forward.1} parent=1 // pred_region
      %369 = dma.done [#allocation4], 16
    $region37: #{mlp_forward.1} parent=1 // pred_fallthru
      _
    %370 = vsyncpa [#allocation4], 1

</llo_original>
